<compile_context>
chip_gen: v5e
topology: v5e:2x2
jax: 0.10.0
libtpu: 0.0.40
codegen_flags: <defaults>
</compile_context>

<pallas_src>
import functools

import jax
import jax.numpy as jnp
from jax.experimental import pallas as pl
from jax.experimental.pallas import tpu as pltpu


def _select_dma_kernel(frozen_ref, param_hbm, val_hbm, out_hbm, sem):
    """Copy exactly one of {param, val} HBM->HBM, chosen by the SMEM flag."""
    frozen = frozen_ref[0]

    @pl.when(frozen == 0)
    def _():
        cp = pltpu.make_async_copy(param_hbm, out_hbm, sem)
        cp.start()
        cp.wait()

    @pl.when(frozen != 0)  # any non-zero value is treated as frozen (no OOB risk)
    def _():
        cp = pltpu.make_async_copy(val_hbm, out_hbm, sem)
        cp.start()
        cp.wait()


@functools.lru_cache(maxsize=None)
def _make_dynamic_forward(shape, dtype_name):
    """Build (once per shape/dtype) the jitted single-DMA select kernel."""
    dtype = jnp.dtype(dtype_name)
    call = pl.pallas_call(
        _select_dma_kernel,
        out_shape=jax.ShapeDtypeStruct(shape, dtype),
        in_specs=[
            pl.BlockSpec(memory_space=pltpu.MemorySpace.SMEM),  # frozen flag
            pl.BlockSpec(memory_space=pl.ANY),                  # param (HBM)
            pl.BlockSpec(memory_space=pl.ANY),                  # val   (HBM)
        ],
        out_specs=pl.BlockSpec(memory_space=pl.ANY),            # output (HBM)
        scratch_shapes=[pltpu.SemaphoreType.DMA],
    )
    return jax.jit(call)


class ParameterPallas:
    """Mirrors the PyTorch `Parameter` module (forward / freeze / unfreeze)."""

    def __init__(self, val, frozen=False):
        val = jnp.asarray(val)
        if not jnp.issubdtype(val.dtype, jnp.floating):
            # torch.Tensor(val) default-float behaviour for lists / int inputs.
            val = val.astype(jnp.float32)
        # Float inputs keep their native dtype (bf16 stays bf16).
        self.shape = val.shape
        self.dtype = val.dtype

        self.val = val
        self.param = val  # nn.Parameter(val): same initial values
        self.frozen = bool(frozen)
        # Persistent device-side flag (no per-call host->device transfer).
        self._frozen_dev = jnp.array([1 if self.frozen else 0], dtype=jnp.int32)
        self._dyn_fwd = _make_dynamic_forward(tuple(self.shape), self.dtype.name)

    def set_param(self, new_param):
        """External update of the trainable tensor (e.g. optimizer step).

        No packing/padding happens here — param and val stay separate HBM
        arrays, so optimizer steps cost nothing extra in this module.
        """
        self.param = jnp.asarray(new_param, dtype=self.dtype).reshape(self.shape)

    # --- module API ----------------------------------------------------------
    def forward(self, dynamic=False):
        if not dynamic:
            # Static fast path: predicate is a Python bool, resolved at trace
            # time. No kernel, no HBM copy — just return the right array.
            return self.val if self.frozen else self.param
        # Runtime-dynamic path: one HBM->HBM DMA whose source is selected by
        # the device-resident frozen flag inside the kernel.
        return self._dyn_fwd(self._frozen_dev, self.param, self.val)

    def freeze(self):
        self.val = self.param  # detach().clone() — values only, in JAX
        self.frozen = True
        self._frozen_dev = jnp.array([1], dtype=jnp.int32)

    def unfreeze(self):
        self.frozen = False
        self._frozen_dev = jnp.array([0], dtype=jnp.int32)

    def __repr__(self):
        return 'val: {}, param: {}'.format(self.val, self.param)

    # TODO(synk): `.to(self.param.device)` and nn.Parameter autograd tracking
    # have no Pallas equivalent; JAX arrays are already device-resident and
    # gradients are handled by the surrounding JAX program.


if __name__ == "__main__":
    key = jax.random.PRNGKey(0)
    k_val, k_param = jax.random.split(key)

    shape = (8, 32)  # small learnable parameter tensor
    init_val = jax.random.normal(k_val, shape, dtype=jnp.float32)

    mod = ParameterPallas(init_val, frozen=False)
    # Simulate training having moved the trainable param away from val.
    mod.set_param(mod.param + jax.random.normal(k_param, shape, dtype=jnp.float32))

    # Static fast path (no kernel): unfrozen -> param.
    out_static = jax.block_until_ready(mod.forward())
    assert jnp.allclose(out_static, mod.param), "static unfrozen path mismatch"

    # Dynamic Pallas path: unfrozen -> param (DMA source chosen by the flag).
    out_dyn_unfrozen = jax.block_until_ready(mod.forward(dynamic=True))
    assert jnp.allclose(out_dyn_unfrozen, mod.param), "dynamic unfrozen path mismatch"

    # Freeze, then move param again; frozen forward must return the stored val.
    mod.freeze()
    frozen_val = mod.val
    mod.set_param(mod.param + 7.0)  # param diverges; val should win while frozen

    out_static_frozen = jax.block_until_ready(mod.forward())
    assert jnp.allclose(out_static_frozen, frozen_val), "static frozen path mismatch"

    out_dyn_frozen = jax.block_until_ready(mod.forward(dynamic=True))
    assert jnp.allclose(out_dyn_frozen, frozen_val), "dynamic frozen path mismatch"

    # Unfreeze again: dynamic path must immediately track param (nothing stale).
    mod.unfreeze()
    out_dyn_unfrozen2 = jax.block_until_ready(mod.forward(dynamic=True))
    assert jnp.allclose(out_dyn_unfrozen2, mod.param), "dynamic unfreeze path mismatch"

    # Native-dtype check: bf16 stays bf16 end-to-end (half the HBM traffic).
    mod_bf16 = ParameterPallas(init_val.astype(jnp.bfloat16), frozen=True)
    out_bf16 = jax.block_until_ready(mod_bf16.forward(dynamic=True))
    assert out_bf16.dtype == jnp.bfloat16, "bf16 dtype not preserved"
    assert jnp.allclose(out_bf16.astype(jnp.float32),
                        mod_bf16.val.astype(jnp.float32)), "bf16 dynamic path mismatch"

    print("KERNEL_OK")
</pallas_src>

<mosaic_0001>
module attributes {stable_mosaic.version = 11 : i64} {
  func.func @_select_dma_kernel(%arg0: memref<1xi32, #tpu.memory_space<smem>>, %arg1: memref<8x32xf32, #tpu.memory_space<any>>, %arg2: memref<8x32xf32, #tpu.memory_space<any>>, %arg3: memref<8x32xf32, #tpu.memory_space<any>>, %arg4: memref<!tpu.dma_semaphore, #tpu.memory_space<semaphore_mem>>) attributes {dimension_semantics = [], scalar_prefetch = 0 : i64, scratch_operands = 1 : i64, tpu.core_type = #tpu.core_type<tc>} {
    %c0 = arith.constant 0 : index
    %0 = memref.load %arg0[%c0] : memref<1xi32, #tpu.memory_space<smem>>
    %c0_i32 = arith.constant 0 : i32
    %1 = arith.cmpi eq, %0, %c0_i32 : i32
    %2 = arith.extui %1 : i1 to i32
    %c0_i32_0 = arith.constant 0 : i32
    %3 = arith.cmpi ne, %2, %c0_i32_0 : i32
    scf.if %3 {
      tpu.enqueue_dma source(%arg1 : memref<8x32xf32, #tpu.memory_space<any>>) target(%arg3 : memref<8x32xf32, #tpu.memory_space<any>>) target_semaphore(%arg4 : memref<!tpu.dma_semaphore, #tpu.memory_space<semaphore_mem>>)
      tpu.wait_dma2 semaphore(%arg4 : memref<!tpu.dma_semaphore, #tpu.memory_space<semaphore_mem>>) src(%arg1 : memref<8x32xf32, #tpu.memory_space<any>>) dst(%arg3 : memref<8x32xf32, #tpu.memory_space<any>>)
    } else {
    }
    %c0_i32_1 = arith.constant 0 : i32
    %4 = arith.cmpi ne, %0, %c0_i32_1 : i32
    %5 = arith.extui %4 : i1 to i32
    %c0_i32_2 = arith.constant 0 : i32
    %6 = arith.cmpi ne, %5, %c0_i32_2 : i32
    scf.if %6 {
      tpu.enqueue_dma source(%arg2 : memref<8x32xf32, #tpu.memory_space<any>>) target(%arg3 : memref<8x32xf32, #tpu.memory_space<any>>) target_semaphore(%arg4 : memref<!tpu.dma_semaphore, #tpu.memory_space<semaphore_mem>>)
      tpu.wait_dma2 semaphore(%arg4 : memref<!tpu.dma_semaphore, #tpu.memory_space<semaphore_mem>>) src(%arg2 : memref<8x32xf32, #tpu.memory_space<any>>) dst(%arg3 : memref<8x32xf32, #tpu.memory_space<any>>)
    } else {
    }
    return
  }
}

</mosaic_0001>

<llo_original>
// kernel: tpu_custom_call.1
$region0: #{tpu_custom_call.1}
  #allocation0 [shape = 'u32[]', space=smem, size = 0x4, offset = 0x4, fixed_abs, tag = 'smem constant byte address 0x4 - core index']
  #allocation1 [shape = 'u32[72,128]{1,0:T(1,128)}', space=vmem, size = 0x9000, scoped, tag = 'internal scratch']
  #allocation2 [shape = 's32[1]{0}', space=sflag, size = 0x4, scoped, tag = 'scratch operand']
  #allocation3 [shape = 's32[1]{0:T(128)S(6)}', space=smem, size = 0x200, scoped, tag = 'scoped memory for tpu_custom_call.1']
  #allocation4 [shape = 's32[]', space=sflag, size = 0x4, offset = 0, fixed_abs, tag = 'sflag constant byte address 0x0 - dummy sync flag']
  #allocation5 [shape = 'u32[0]{0}', space=smem, size = 0, offset = 0, fixed_abs, tag = 'smem constant byte address 0x0 - null']
  #allocation6 [shape = 's32[]', space=sflag, size = 0x4, offset = 0, fixed_abs, tag = 'sflag constant byte address 0x0 - dummy sync flag']
  #allocation7 [shape = 'u32[0]{0}', space=smem, size = 0, offset = 0, fixed_abs, tag = 'smem constant byte address 0x0 - null']
  %s0 = inlined_call_operand.<no memory space> [shape: s32[1], index: 0, kind: input, shape index: {}]
  %s1 = inlined_call_operand.hbm [shape: f32[8,32], index: 1, kind: input, shape index: {}]
  %s2 = inlined_call_operand.hbm [shape: f32[8,32], index: 2, kind: input, shape index: {}]
  %s3 = inlined_call_operand.hbm [shape: f32[8,32], index: 3, kind: output, shape index: {}]
  %s4 = sld [smem:[#allocation0]]
  $region14: #{tpu_custom_call.1} parent=0
    _
  %s6 = ssub.s32 1, %s4
  %s7 = scalar_select 0, %s6, %s4
  %8 = sst [smem:[#allocation3]] %s0
  // Predicated region
  $region2: #{tpu_custom_call.1} parent=0 // pred_check
    _
  $region3: #{tpu_custom_call.1} parent=0 // pred_check_branch
    %10 = sbr.rel (0) target = $region5
  $region4: #{tpu_custom_call.1} parent=0 // pred_region
    _
  $region5: #{tpu_custom_call.1} parent=0 // pred_fallthru
    _
  %s11 = sld [smem:[#allocation3]]
  %p12 = scmp.eq.s32.totalorder %s11, 0
  // Predicated region
  $region6: #{tpu_custom_call.1} parent=0 // pred_check
    %p13 = pneg %p12
  $region7: #{tpu_custom_call.1} parent=0 // pred_check_branch
    %15 = sbr.rel (%p13) target = $region9
  $region8: #{tpu_custom_call.1} parent=0 // pred_region
    %s17 = sshll.u32 1, 14
    %s18 = sxor.u32 4294967295, %s17
    %s20 = sshll.u32 %s1, 4
    %s21 = int_to_ptr.hbm [resolvable:$true] %s20
    %s22 = sshll.u32 %s3, 4
    %s23 = int_to_ptr.hbm [resolvable:$true] %s22
    %26 = dma.general %s21, 128, %s23, [#allocation2], [#allocation4], [#allocation5], 0, 0
    %s27 = smul.u32 8, 1
    %s28 = sshll.u32 %s27, 4
    %29 = dma.done [#allocation2], %s28
  $region9: #{tpu_custom_call.1} parent=0 // pred_fallthru
    _
  %p30 = scmp.ne.s32.totalorder %s11, 0
  // Predicated region
  $region10: #{tpu_custom_call.1} parent=0 // pred_check
    %p31 = pneg %p30
  $region11: #{tpu_custom_call.1} parent=0 // pred_check_branch
    %33 = sbr.rel (%p31) target = $region13
  $region12: #{tpu_custom_call.1} parent=0 // pred_region
    %s35 = sshll.u32 1, 14
    %s36 = sxor.u32 4294967295, %s35
    %s38 = sshll.u32 %s2, 4
    %s39 = int_to_ptr.hbm [resolvable:$true] %s38
    %s40 = sshll.u32 %s3, 4
    %s41 = int_to_ptr.hbm [resolvable:$true] %s40
    %44 = dma.general %s39, 128, %s41, [#allocation2], [#allocation6], [#allocation7], 0, 0
    %s45 = smul.u32 8, 1
    %s46 = sshll.u32 %s45, 4
    %47 = dma.done [#allocation2], %s46
  $region13: #{tpu_custom_call.1} parent=0 // pred_fallthru
    _
  %48 = vsyncmov [#allocation2]
  %s49 = vpop.sfrf %48
  %p50 = scmp.eq.s32.totalorder %s49, 0
  %p51 = pneg %p50
  %53 = shalt.err (%p51)

</llo_original>
